<compile_context>
chip_gen: v7x
topology: tpu7x:2x2x1
jax: 0.10.0
libtpu: 0.0.40
codegen_flags: <defaults>
</compile_context>

<pallas_src>
import jax
import jax.numpy as jnp
from jax.experimental import pallas as pl
from jax.experimental.pallas import tpu as pltpu


def _prelu_kernel(w_ref, x_ref, o_ref):
    # x_ref / o_ref block: (TILE_R, TILE_L); w_ref block: (TILE_R, 1)
    x = x_ref[...]
    w = w_ref[...]                       # same dtype as x; broadcasts over lanes
    o_ref[...] = jnp.where(x > 0, x, w * x)


def _pick_tiles(R, L, dtype):
    """Pick a lane-dense, VMEM-bounded (rows, cols) block shape."""
    itemsize = jnp.dtype(dtype).itemsize
    sub = max(8, 32 // itemsize)          # sublane packing: 8 f32, 16 bf16, 32 int8
    target = (1 << 20) // itemsize        # ~1 MiB of elements per block

    # Lane (last) dim: full extent if not 128-aligned (always legal),
    # otherwise a large multiple of 128.
    if L % 128 == 0:
        tl = min(L, max(128, ((target // sub) // 128) * 128))
    else:
        tl = L

    # Sublane (second-to-last) dim: full extent if not aligned, otherwise a
    # multiple of the packing factor sized so blocks stay ~1 MiB.
    rows = max(1, target // max(tl, 1))
    if R % sub == 0:
        tr = min(R, max(sub, (rows // sub) * sub))
    else:
        tr = R
    return tr, tl


def prelu_pallas(x, weight):
    """x: (N, C, H, W); weight: (P,) with P in {1, C} (PyTorch PReLU)."""
    N, C, H, W = x.shape
    P = weight.shape[0]
    assert P in (1, C), "num_parameters must be 1 or C"

    R, L = N * C, H * W
    x2 = x.reshape(R, L)                              # free contiguous reshape

    # One weight scalar per flattened (n, c) row, pre-cast to x.dtype so the
    # kernel never promotes the whole tile to f32.
    if P == 1:
        w_rows = jnp.broadcast_to(weight.astype(x.dtype), (R,))
    else:
        w_rows = jnp.tile(weight.astype(x.dtype), N)  # row r -> channel r % C
    w_rows = w_rows.reshape(R, 1)

    tr, tl = _pick_tiles(R, L, x.dtype)
    grid = (pl.cdiv(R, tr), pl.cdiv(L, tl))

    itemsize = jnp.dtype(x.dtype).itemsize
    cost = pl.CostEstimate(
        flops=3 * x.size,
        transcendentals=0,
        bytes_accessed=2 * x.size * itemsize + R * itemsize,
    )

    out2 = pl.pallas_call(
        _prelu_kernel,
        out_shape=jax.ShapeDtypeStruct((R, L), x.dtype),
        grid=grid,
        in_specs=[
            pl.BlockSpec((tr, 1), lambda i, j: (i, 0)),   # per-row weights
            pl.BlockSpec((tr, tl), lambda i, j: (i, j)),  # x tile
        ],
        out_specs=pl.BlockSpec((tr, tl), lambda i, j: (i, j)),
        compiler_params=pltpu.CompilerParams(
            dimension_semantics=("parallel", "parallel"),
        ),
        cost_estimate=cost,
    )(w_rows, x2)

    return out2.reshape(N, C, H, W)


if __name__ == "__main__":
    # Matches nn.PReLU(num_parameters=C, init=0.25) on a small NCHW input.
    N, C, H, W = 2, 4, 16, 16
    init = 0.25

    key = jax.random.PRNGKey(0)
    x = jax.random.normal(key, (N, C, H, W), dtype=jnp.float32)
    weight = jnp.full((C,), init, dtype=jnp.float32)

    out = jax.block_until_ready(prelu_pallas(x, weight))

    # Reference: the PyTorch module's forward, relu(x) - w * relu(-x).
    ref = jnp.maximum(x, 0.0) - weight.reshape(1, C, 1, 1) * jnp.maximum(-x, 0.0)
    assert out.shape == x.shape and out.dtype == x.dtype
    assert jnp.allclose(out, ref, atol=1e-6, rtol=1e-6)

    # Also exercise the num_parameters == 1 path.
    w1 = jnp.full((1,), init, dtype=jnp.float32)
    out1 = jax.block_until_ready(prelu_pallas(x, w1))
    ref1 = jnp.maximum(x, 0.0) - init * jnp.maximum(-x, 0.0)
    assert jnp.allclose(out1, ref1, atol=1e-6, rtol=1e-6)

    print("KERNEL_OK")
</pallas_src>

<mosaic_0001>
module attributes {stable_mosaic.version = 11 : i64} {
  func.func @_prelu_kernel(%arg0: i32, %arg1: i32, %arg2: memref<8x1xf32, #tpu.memory_space<vmem>>, %arg3: memref<8x256xf32, #tpu.memory_space<vmem>>, %arg4: memref<8x256xf32, #tpu.memory_space<vmem>>) attributes {dimension_semantics = [#tpu.dimension_semantics<parallel>, #tpu.dimension_semantics<parallel>], iteration_bounds = array<i64: 1, 1>, scalar_prefetch = 0 : i64, scratch_operands = 0 : i64, tpu.core_type = #tpu.core_type<tc>, window_params = [{transform_indices = @transform_0, window_bounds = array<i64: 8, 1>}, {transform_indices = @transform_1, window_bounds = array<i64: 8, 256>}, {transform_indices = @transform_2, window_bounds = array<i64: 8, 256>}]} {
    %c0 = arith.constant 0 : index
    %c0_0 = arith.constant 0 : index
    %0 = vector.load %arg3[%c0, %c0_0] : memref<8x256xf32, #tpu.memory_space<vmem>>, vector<8x256xf32>
    %c0_1 = arith.constant 0 : index
    %c0_2 = arith.constant 0 : index
    %1 = vector.load %arg2[%c0_1, %c0_2] : memref<8x1xf32, #tpu.memory_space<vmem>>, vector<8x1xf32>
    %cst = arith.constant 0.000000e+00 : f32
    %2 = vector.broadcast %cst : f32 to vector<8x256xf32>
    %3 = arith.cmpf ogt, %0, %2 : vector<8x256xf32>
    %4 = vector.broadcast %1 : vector<8x1xf32> to vector<8x256xf32>
    %5 = arith.mulf %4, %0 : vector<8x256xf32>
    %6 = arith.select %3, %0, %5 : vector<8x256xi1>, vector<8x256xf32>
    %c0_3 = arith.constant 0 : index
    %c0_4 = arith.constant 0 : index
    %7 = vector.load %arg4[%c0_3, %c0_4] : memref<8x256xf32, #tpu.memory_space<vmem>>, vector<8x256xf32>
    tpu.vector_store %arg4[%c0_3, %c0_4], %6 {strides = array<i32>} : memref<8x256xf32, #tpu.memory_space<vmem>>, vector<8x256xf32>,
    return
  }
  func.func @transform_0(%arg0: i32, %arg1: i32) -> (i32, i32) {
    %c0_i32 = arith.constant 0 : i32
    %c0_i32_0 = arith.constant 0 : i32
    return %arg0, %c0_i32 : i32, i32
  }
  func.func @transform_1(%arg0: i32, %arg1: i32) -> (i32, i32) {
    %c0_i32 = arith.constant 0 : i32
    return %arg0, %arg1 : i32, i32
  }
  func.func @transform_2(%arg0: i32, %arg1: i32) -> (i32, i32) {
    %c0_i32 = arith.constant 0 : i32
    return %arg0, %arg1 : i32, i32
  }
}

</mosaic_0001>

<llo_original>
// kernel: tpu_custom_call.1
$region0: #{tpu_custom_call.1}
  #allocation0 [shape = 'u32[]', space=smem, size = 0x4, offset = 0x4, fixed_abs, tag = 'smem constant byte address 0x4 - core index']
  #allocation1 [shape = 'u32[144,128]{1,0:T(1,128)}', space=vmem, size = 0x12000, scoped, tag = 'internal scratch']
  %s0 = inlined_call_operand.vmem [shape: f32[8,1], index: 0, kind: input, shape index: {}]
  %s1 = inlined_call_operand.hbm [shape: f32[8,256], index: 1, kind: input, shape index: {}]
  %s2 = inlined_call_operand.hbm [shape: f32[8,256], index: 2, kind: output, shape index: {}]
  %s3 = sld [smem:[#allocation0]]
  $region22: #{tpu_custom_call.1} parent=0
    _
  %s5 = ssub.s32 1, %s3
  %s6 = scalar_select 0, %s5, %s3
  $region1: #{tpu_custom_call.1} parent=0
    #allocation2 [shape = 'u8[8192]{0}', space=vmem, size = 0x2000, scoped, tag = 'input window, operand 1, single buffered']
    #allocation3 [shape = 's32[1]{0}', space=sflag, size = 0x4, scoped, tag = 'scoped memory for tpu_custom_call.1']
    #allocation4 [shape = 's32[1]{0}', space=sflag, size = 0x4, scoped, tag = 'scoped memory for tpu_custom_call.1']
    #allocation5 [shape = 'u8[8192]{0}', space=vmem, size = 0x2000, scoped, tag = 'output window, operand 0, single buffered']
    %7 = vsyncpa [#allocation3], 0
    %8 = vsyncpa [#allocation4], 0
    // Predicated region
    $region2: #{tpu_custom_call.1} parent=1 // pred_check
      _
    $region3: #{tpu_custom_call.1} parent=1 // pred_check_branch
      %10 = sbr.rel (0) target = $region5
    $region4: #{tpu_custom_call.1} parent=1 // pred_region
      _
    $region5: #{tpu_custom_call.1} parent=1 // pred_fallthru
      _
    // Predicated region
    $region6: #{tpu_custom_call.1} parent=1 // pred_check
      _
    $region7: #{tpu_custom_call.1} parent=1 // pred_check_branch
      %12 = sbr.rel (0) target = $region9
    $region8: #{tpu_custom_call.1} parent=1 // pred_region
      %s14 = ssub.s32 256, 256
      %15 = vsyncadd [#allocation3], %s14
      %s17 = sshll.u32 [#allocation2], 4
      %s18 = int_to_ptr.vmem [resolvable:$true] %s17
      %20 = dma.hbm_to_vmem [thread:$0]  %s1, 256, %s18, [#allocation3]
    $region9: #{tpu_custom_call.1} parent=1 // pred_fallthru
      _
    // Predicated region
    $region10: #{tpu_custom_call.1} parent=1 // pred_check
      _
    $region11: #{tpu_custom_call.1} parent=1 // pred_check_branch
      %22 = sbr.rel (0) target = $region13
    $region12: #{tpu_custom_call.1} parent=1 // pred_region
      %23 = dma.done [#allocation3], 256
    $region13: #{tpu_custom_call.1} parent=1 // pred_fallthru
      _
    %v24 = vld [vmem:[#allocation2] sm:$0xff]
    %v25 = vld [vmem:[#allocation2 + $0x8] sm:$0xff]
    %v26 = vld [vmem:[%s0] sm:$0xff]
    %vm27 = vcmp.gt.f32.partialorder %v24, 0.0
    %vm28 = vcmp.gt.f32.partialorder %v25, 0.0
    %30 = vset.pattern.permute.xlu0 0
    %31 = vperm.xlu0 %30, %v26
    %v32 = vpop.permute.xlu0 %31
    %v34 = vmul.f32 %v32, %v24
    %v35 = vmul.f32 %v32, %v25
    %v36 = vsel %vm27, %v24, %v34
    %v37 = vsel %vm28, %v25, %v35
    %38 = vst [vmem:[#allocation5] sm:$0xff] %v36
    %39 = vst [vmem:[#allocation5 + $0x8] sm:$0xff] %v37
    // Predicated region
    $region14: #{tpu_custom_call.1} parent=1 // pred_check
      _
    $region15: #{tpu_custom_call.1} parent=1 // pred_check_branch
      %41 = sbr.rel (0) target = $region17
    $region16: #{tpu_custom_call.1} parent=1 // pred_region
      %s43 = ssub.s32 256, 256
      %44 = vsyncadd [#allocation4], %s43
      %s46 = sshll.u32 [#allocation5], 4
      %s47 = int_to_ptr.vmem [resolvable:$true] %s46
      %49 = dma.vmem_to_hbm [thread:$0]  %s47, 256, %s2, [#allocation4]
    $region17: #{tpu_custom_call.1} parent=1 // pred_fallthru
      _
    // Predicated region
    $region18: #{tpu_custom_call.1} parent=1 // pred_check
      _
    $region19: #{tpu_custom_call.1} parent=1 // pred_check_branch
      %51 = sbr.rel (0) target = $region21
    $region20: #{tpu_custom_call.1} parent=1 // pred_region
      %52 = dma.done [#allocation4], 256
    $region21: #{tpu_custom_call.1} parent=1 // pred_fallthru
      _
    %53 = vsyncpa [#allocation3], 1
    %54 = vsyncpa [#allocation4], 1

</llo_original>
